<compile_context>
chip_gen: v7x
topology: tpu7x:2x2x1
jax: 0.10.0
libtpu: 0.0.40
codegen_flags: <defaults>
</compile_context>

<pallas_src>
import functools
import math

import numpy as np
import jax
import jax.numpy as jnp
from jax.experimental import pallas as pl


def _round_up(x, m):
    return ((x + m - 1) // m) * m


def _blkdiag(a, b):
    a = np.asarray(a, np.float32)
    b = np.asarray(b, np.float32)
    out = np.zeros((a.shape[0] + b.shape[0], a.shape[1] + b.shape[1]), np.float32)
    out[: a.shape[0], : a.shape[1]] = a
    out[a.shape[0]:, a.shape[1]:] = b
    return out


# ----------------------------------------------------------------------------
# Fused Pallas kernel
# ----------------------------------------------------------------------------
def _dg3_fused_kernel(idx_ref, hs_ref, hf_ref, pw_ref, w_ref, o_ref, *,
                      no_pi, num_nodes, layout):
    f32 = jnp.float32

    def W(name):                           # static slab slice -> free view
        off, rows = layout[name]
        return w_ref[pl.ds(off, rows), :]

    # --- one-shot PI/PO row gather of [hs|hf] via a selection matmul (single MXU op) ---
    col = jax.lax.broadcasted_iota(jnp.int32, (2 * no_pi, num_nodes), 1)
    sel = (idx_ref[...] == col).astype(f32)                        # [2p, n] one-hot rows
    x = jnp.concatenate([hs_ref[...], hf_ref[...]], axis=-1)       # [n, 2d]
    xsel = jnp.dot(sel, x, preferred_element_type=f32)             # [2p, 2d]
    x_pi, x_po = xsel[:no_pi], xsel[no_pi:]                        # [p, 2d] each

    bias = W("BIAS")                                               # [8, L]
    b1, b2 = bias[0:1], bias[1:2]
    hb1, hb2, hb3 = bias[2:3], bias[3:4], bias[4:5]

    # --- fused stru_pool + func_pool (block-diagonal weights); mean moved before layer 2 ---
    pre = (jnp.dot(x_pi, W("W1A"), preferred_element_type=f32)
           + jnp.dot(x_po, W("W1B"), preferred_element_type=f32) + b1)
    pooled = jnp.mean(jnp.maximum(pre, 0.0), axis=0, keepdims=True)         # [1, L]
    graphs = jnp.dot(pooled, W("W2"), preferred_element_type=f32) + b2      # [1, L] = [hs_graph|hf_graph|0]

    # --- fused stru_net + func_net heads (block-structured weights) ---
    h1 = jnp.maximum(
        jnp.dot(graphs, W("HW1G"), preferred_element_type=f32)
        + jnp.dot(pw_ref[...], W("HW1P"), preferred_element_type=f32) + hb1, 0.0)
    h2 = jnp.maximum(jnp.dot(h1, W("HW2"), preferred_element_type=f32) + hb2, 0.0)
    out3 = jnp.dot(h2, W("HW3"), preferred_element_type=f32) + hb3          # [1, L]: [fastsim_logit, ppa0, ppa1, 0...]

    lane = jax.lax.broadcasted_iota(jnp.int32, out3.shape, 1)
    head_row = jnp.where(lane == 0, jax.nn.sigmoid(out3), out3)             # sigmoid only on fastsim lane

    # single unmasked full-width store
    o_ref[...] = jnp.concatenate([graphs, head_row], axis=0).astype(o_ref.dtype)


# ----------------------------------------------------------------------------
# Parameter construction (deterministic, PyTorch-Linear-style init)
# ----------------------------------------------------------------------------
def _linear_params(key, fan_in, fan_out):
    k1, k2 = jax.random.split(key)
    bound = 1.0 / math.sqrt(fan_in)
    w = jax.random.uniform(k1, (fan_in, fan_out), jnp.float32, -bound, bound)
    b = jax.random.uniform(k2, (1, fan_out), jnp.float32, -bound, bound)
    return w, b


def make_params(key, dim_hidden, no_pi, mlp_hidden):
    keys = jax.random.split(key, 10)
    sp_w1, sp_b1 = _linear_params(keys[0], 2 * dim_hidden, dim_hidden)
    sp_w2, sp_b2 = _linear_params(keys[1], dim_hidden, dim_hidden)
    fp_w1, fp_b1 = _linear_params(keys[2], 2 * dim_hidden, dim_hidden)
    fp_w2, fp_b2 = _linear_params(keys[3], dim_hidden, dim_hidden)
    fn_in = dim_hidden * no_pi + dim_hidden
    fn_w1, fn_b1 = _linear_params(keys[4], fn_in, mlp_hidden)
    fn_w2, fn_b2 = _linear_params(keys[5], mlp_hidden, mlp_hidden)
    fn_w3, fn_b3 = _linear_params(keys[6], mlp_hidden, 1)
    sn_w1, sn_b1 = _linear_params(keys[7], dim_hidden, mlp_hidden)
    sn_w2, sn_b2 = _linear_params(keys[8], mlp_hidden, mlp_hidden)
    sn_w3, sn_b3 = _linear_params(keys[9], mlp_hidden, 2)
    return {
        "stru_pool": (sp_w1, sp_b1, sp_w2, sp_b2),
        "func_pool": (fp_w1, fp_b1, fp_w2, fp_b2),
        "func_net": (fn_w1, fn_b1, fn_w2, fn_b2, fn_w3, fn_b3),
        "stru_net": (sn_w1, sn_b1, sn_w2, sn_b2, sn_w3, sn_b3),
    }


# ----------------------------------------------------------------------------
# One-time weight folding + packing into a single (8,128)-aligned slab (hoisted)
# ----------------------------------------------------------------------------
def pack_params(params, dim_hidden, no_pi, mlp_hidden, lanes=128):
    d, H, p = dim_hidden, mlp_hidden, no_pi
    assert 2 * d <= lanes and 2 * H <= lanes and 3 <= lanes

    sp_w1, sp_b1, sp_w2, sp_b2 = (np.asarray(t, np.float32) for t in params["stru_pool"])
    fp_w1, fp_b1, fp_w2, fp_b2 = (np.asarray(t, np.float32) for t in params["func_pool"])
    fn_w1, fn_b1, fn_w2, fn_b2, fn_w3, fn_b3 = (np.asarray(t, np.float32) for t in params["func_net"])
    sn_w1, sn_b1, sn_w2, sn_b2, sn_w3, sn_b3 = (np.asarray(t, np.float32) for t in params["stru_net"])

    # Fused PoolNet pair: concat([x[PIs], x[POs]], -1) @ W1 split into PI/PO halves,
    # block-diagonal across the two PoolNets (lanes 0..d-1 = stru, d..2d-1 = func).
    W1A = _blkdiag(sp_w1[:d], fp_w1[:d])
    W1B = _blkdiag(sp_w1[d:], fp_w1[d:])
    W2 = _blkdiag(sp_w2, fp_w2)

    # Fused heads. Fold torch.cat([pi_workload]*dim_hidden, ...) @ fn_w1 into a
    # row-summed weight (exact): pw_rep @ fn_w1[:d*p] == pw @ sum_r fn_w1[r*p:(r+1)*p].
    fn_w1pw = fn_w1[: d * p].reshape(d, p, H).sum(axis=0)      # [p, H]
    fn_w1hf = fn_w1[d * p:]                                    # [d, H]
    HW1G = np.zeros((2 * d, 2 * H), np.float32)
    HW1G[:d, :H] = sn_w1                                       # hs_graph -> stru hidden
    HW1G[d:, H:] = fn_w1hf                                     # hf_graph -> func hidden
    HW1P = np.zeros((p, 2 * H), np.float32)
    HW1P[:, H:] = fn_w1pw                                      # pi_workload -> func hidden
    HW2 = _blkdiag(sn_w2, fn_w2)
    HW3 = np.zeros((2 * H, 3), np.float32)
    HW3[H:, 0:1] = fn_w3                                       # col 0: fastsim logit
    HW3[:H, 1:3] = sn_w3                                       # cols 1..2: ppa

    BIAS = np.zeros((8, lanes), np.float32)
    BIAS[0, : 2 * d] = np.concatenate([sp_b1, fp_b1], -1)[0]
    BIAS[1, : 2 * d] = np.concatenate([sp_b2, fp_b2], -1)[0]
    BIAS[2, : 2 * H] = np.concatenate([sn_b1, fn_b1], -1)[0]
    BIAS[3, : 2 * H] = np.concatenate([sn_b2, fn_b2], -1)[0]
    BIAS[4, :3] = np.concatenate([fn_b3, sn_b3], -1)[0]

    # (name, matrix, rows the kernel slices).  Blocks whose contraction operand is a
    # zero-padded `lanes`-wide intermediate get `lanes` rows so the padding flows exactly.
    specs = [
        ("W1A", W1A, 2 * d),
        ("W1B", W1B, 2 * d),
        ("W2", W2, lanes),
        ("HW1G", HW1G, lanes),
        ("HW1P", HW1P, p),
        ("HW2", HW2, lanes),
        ("HW3", HW3, lanes),
        ("BIAS", BIAS, 8),
    ]
    layout, blocks, off = {}, [], 0
    for name, mat, used_rows in specs:
        block_rows = _round_up(max(used_rows, mat.shape[0]), 8)
        blk = np.zeros((block_rows, lanes), np.float32)
        blk[: mat.shape[0], : mat.shape[1]] = mat
        blocks.append(blk)
        layout[name] = (off, used_rows)
        off += block_rows
    slab = jnp.asarray(np.concatenate(blocks, axis=0))          # [R, 128] f32, R multiple of 8
    return slab, layout


# ----------------------------------------------------------------------------
# DeepGate3 forward (single fused pallas_call)
# ----------------------------------------------------------------------------
def deepgate3_forward(hs, hf, PIs, POs, pi_workload, w_slab, layout, dim_hidden):
    d = dim_hidden
    no_pi = int(PIs.shape[0])
    assert int(POs.shape[0]) == no_pi, "reference concat requires len(PIs) == len(POs)"
    num_nodes = int(hs.shape[0])
    lanes = int(w_slab.shape[1])

    idx = jnp.concatenate([PIs, POs]).astype(jnp.int32).reshape(2 * no_pi, 1)
    pw = pi_workload.astype(jnp.float32).reshape(1, no_pi)

    kernel = functools.partial(_dg3_fused_kernel, no_pi=no_pi,
                               num_nodes=num_nodes, layout=layout)

    flops = 2 * (2 * no_pi * num_nodes * 2 * d      # selection-matmul gather
                 + 2 * no_pi * 2 * d * lanes        # pool layer 1 (PI + PO)
                 + 4 * lanes * lanes                # pool L2 + head L1/L2/L3
                 + no_pi * lanes)                   # pi_workload branch
    bytes_accessed = 4 * (idx.size + hs.size + hf.size + pw.size + w_slab.size + 2 * lanes)
    cost = pl.CostEstimate(flops=flops, transcendentals=lanes,
                           bytes_accessed=bytes_accessed)

    packed = pl.pallas_call(
        kernel,
        out_shape=jax.ShapeDtypeStruct((2, lanes), jnp.float32),
        cost_estimate=cost,
    )(idx, hs.astype(jnp.float32), hf.astype(jnp.float32), pw, w_slab)

    hs_graph = packed[0:1, :d]
    hf_graph = packed[0:1, d:2 * d]
    fastsim_output = packed[1:2, 0:1]
    ppa_output = packed[1:2, 1:3]
    return hs_graph, hf_graph, fastsim_output, ppa_output


# ----------------------------------------------------------------------------
# Pure-JAX reference (mirrors the PyTorch forward, un-fused / un-folded)
# ----------------------------------------------------------------------------
def _reference_forward(hs, hf, PIs, POs, pi_workload, params, dim_hidden):
    def poolnet(x, p):
        w1, b1, w2, b2 = p
        h = jnp.maximum(x @ w1 + b1, 0.0)
        h = h @ w2 + b2
        return jnp.mean(h, axis=0, keepdims=True)

    def mlp3(x, p, sigmoid):
        w1, b1, w2, b2, w3, b3 = p
        h = jnp.maximum(x @ w1 + b1, 0.0)
        h = jnp.maximum(h @ w2 + b2, 0.0)
        o = h @ w3 + b3
        return jax.nn.sigmoid(o) if sigmoid else o

    hs_states = jnp.concatenate([hs[PIs], hs[POs]], axis=-1)
    hf_states = jnp.concatenate([hf[PIs], hf[POs]], axis=-1)
    hs_graph = poolnet(hs_states, params["stru_pool"])
    hf_graph = poolnet(hf_states, params["func_pool"])
    pw_rep = jnp.tile(pi_workload.reshape(1, -1), (1, dim_hidden))
    fastsim_inputs = jnp.concatenate([pw_rep, hf_graph], axis=-1)
    fastsim_output = mlp3(fastsim_inputs, params["func_net"], True)
    ppa_output = mlp3(hs_graph, params["stru_net"], False)
    return hs_graph, hf_graph, fastsim_output, ppa_output


if __name__ == "__main__":
    dim_hidden = 32
    no_pi = 4          # number of PI indices (== number of PO indices)
    num_nodes = 16
    mlp_hidden = 32

    key = jax.random.PRNGKey(0)
    k_hs, k_hf, k_pw, k_par = jax.random.split(key, 4)

    hs = jax.random.normal(k_hs, (num_nodes, dim_hidden), jnp.float32)
    hf = jax.random.normal(k_hf, (num_nodes, dim_hidden), jnp.float32)
    PIs = jnp.arange(no_pi, dtype=jnp.int32)
    POs = jnp.arange(num_nodes - no_pi, num_nodes, dtype=jnp.int32)
    pi_workload = jax.random.uniform(k_pw, (no_pi,), jnp.float32)

    params = make_params(k_par, dim_hidden, no_pi, mlp_hidden)
    # One-time (hoisted) weight folding + slab packing.
    w_slab, layout = pack_params(params, dim_hidden, no_pi, mlp_hidden)

    out = deepgate3_forward(hs, hf, PIs, POs, pi_workload, w_slab, layout, dim_hidden)
    out = jax.block_until_ready(out)

    hs_graph, hf_graph, fastsim_output, ppa_output = out
    assert hs_graph.shape == (1, dim_hidden)
    assert hf_graph.shape == (1, dim_hidden)
    assert fastsim_output.shape == (1, 1)
    assert ppa_output.shape == (1, 2)

    ref = _reference_forward(hs, hf, PIs, POs, pi_workload, params, dim_hidden)
    for got, want in zip(out, ref):
        np.testing.assert_allclose(np.asarray(got), np.asarray(want),
                                   rtol=1e-2, atol=1e-2)

    print("KERNEL_OK")
</pallas_src>

<mosaic_0001>
module attributes {stable_mosaic.version = 11 : i64} {
  func.func @_dg3_fused_kernel(%arg0: memref<8x1xi32, #tpu.memory_space<vmem>>, %arg1: memref<16x32xf32, #tpu.memory_space<vmem>>, %arg2: memref<16x32xf32, #tpu.memory_space<vmem>>, %arg3: memref<1x4xf32, #tpu.memory_space<vmem>>, %arg4: memref<656x128xf32, #tpu.memory_space<vmem>>, %arg5: memref<2x128xf32, #tpu.memory_space<vmem>>) attributes {dimension_semantics = [], scalar_prefetch = 0 : i64, scratch_operands = 0 : i64, tpu.core_type = #tpu.core_type<tc>} {
    %0 = tpu.iota {dimensions = array<i32: 1>} : vector<8x16xi32>
    %c0 = arith.constant 0 : index
    %c0_0 = arith.constant 0 : index
    %1 = vector.load %arg0[%c0, %c0_0] : memref<8x1xi32, #tpu.memory_space<vmem>>, vector<8x1xi32>
    %2 = vector.broadcast %1 : vector<8x1xi32> to vector<8x16xi32>
    %3 = arith.cmpi eq, %2, %0 : vector<8x16xi32>
    %4 = arith.extui %3 : vector<8x16xi1> to vector<8x16xi32>
    %5 = arith.sitofp %4 : vector<8x16xi32> to vector<8x16xf32>
    %c0_1 = arith.constant 0 : index
    %c0_2 = arith.constant 0 : index
    %6 = vector.load %arg1[%c0_1, %c0_2] : memref<16x32xf32, #tpu.memory_space<vmem>>, vector<16x32xf32>
    %c0_3 = arith.constant 0 : index
    %c0_4 = arith.constant 0 : index
    %7 = vector.load %arg2[%c0_3, %c0_4] : memref<16x32xf32, #tpu.memory_space<vmem>>, vector<16x32xf32>
    %8 = tpu.concatenate %6, %7 in 1 : vector<16x32xf32>, vector<16x32xf32> -> vector<16x64xf32>
    %cst = arith.constant dense<0.000000e+00> : vector<8x64xf32>
    %9 = tpu.matmul %5, %8, %cst {dimension_numbers = #tpu.dot_dimension_numbers<[1], [0], [0], [1], [0, 0, 1, 1], [], []>} : vector<8x16xf32>, vector<16x64xf32>, vector<8x64xf32> -> vector<8x64xf32>
    %10 = vector.extract_strided_slice %9 {offsets = [0, 0], sizes = [4, 64], strides = [1, 1]} : vector<8x64xf32> to vector<4x64xf32>
    %11 = vector.extract_strided_slice %9 {offsets = [4, 0], sizes = [4, 64], strides = [1, 1]} : vector<8x64xf32> to vector<4x64xf32>
    %c648 = arith.constant 648 : index
    %c0_5 = arith.constant 0 : index
    %12 = vector.load %arg4[%c648, %c0_5] : memref<656x128xf32, #tpu.memory_space<vmem>>, vector<8x128xf32>
    %13 = vector.extract_strided_slice %12 {offsets = [0, 0], sizes = [1, 128], strides = [1, 1]} : vector<8x128xf32> to vector<1x128xf32>
    %14 = vector.extract_strided_slice %12 {offsets = [1, 0], sizes = [1, 128], strides = [1, 1]} : vector<8x128xf32> to vector<1x128xf32>
    %15 = vector.extract_strided_slice %12 {offsets = [2, 0], sizes = [1, 128], strides = [1, 1]} : vector<8x128xf32> to vector<1x128xf32>
    %16 = vector.extract_strided_slice %12 {offsets = [3, 0], sizes = [1, 128], strides = [1, 1]} : vector<8x128xf32> to vector<1x128xf32>
    %17 = vector.extract_strided_slice %12 {offsets = [4, 0], sizes = [1, 128], strides = [1, 1]} : vector<8x128xf32> to vector<1x128xf32>
    %c0_6 = arith.constant 0 : index
    %c0_7 = arith.constant 0 : index
    %18 = vector.load %arg4[%c0_6, %c0_7] : memref<656x128xf32, #tpu.memory_space<vmem>>, vector<64x128xf32>
    %cst_8 = arith.constant dense<0.000000e+00> : vector<4x128xf32>
    %19 = tpu.matmul %10, %18, %cst_8 {dimension_numbers = #tpu.dot_dimension_numbers<[1], [0], [0], [1], [0, 0, 1, 1], [], []>} : vector<4x64xf32>, vector<64x128xf32>, vector<4x128xf32> -> vector<4x128xf32>
    %c64 = arith.constant 64 : index
    %c0_9 = arith.constant 0 : index
    %20 = vector.load %arg4[%c64, %c0_9] : memref<656x128xf32, #tpu.memory_space<vmem>>, vector<64x128xf32>
    %cst_10 = arith.constant dense<0.000000e+00> : vector<4x128xf32>
    %21 = tpu.matmul %11, %20, %cst_10 {dimension_numbers = #tpu.dot_dimension_numbers<[1], [0], [0], [1], [0, 0, 1, 1], [], []>} : vector<4x64xf32>, vector<64x128xf32>, vector<4x128xf32> -> vector<4x128xf32>
    %22 = arith.addf %19, %21 : vector<4x128xf32>
    %23 = vector.broadcast %13 : vector<1x128xf32> to vector<4x128xf32>
    %24 = arith.addf %22, %23 : vector<4x128xf32>
    %cst_11 = arith.constant 0.000000e+00 : f32
    %25 = vector.broadcast %cst_11 : f32 to vector<4x128xf32>
    %26 = arith.maximumf %24, %25 : vector<4x128xf32>
    %cst_12 = arith.constant dense<0.000000e+00> : vector<128xf32>
    %27 = vector.multi_reduction <add>, %26, %cst_12 [0] : vector<4x128xf32> to vector<128xf32>
    %28 = vector.shape_cast %27 : vector<128xf32> to vector<1x128xf32>
    %cst_13 = arith.constant 4.000000e+00 : f32
    %29 = vector.broadcast %cst_13 : f32 to vector<1x128xf32>
    %30 = arith.divf %28, %29 : vector<1x128xf32>
    %c128 = arith.constant 128 : index
    %c0_14 = arith.constant 0 : index
    %31 = vector.load %arg4[%c128, %c0_14] : memref<656x128xf32, #tpu.memory_space<vmem>>, vector<128x128xf32>
    %cst_15 = arith.constant dense<0.000000e+00> : vector<1x128xf32>
    %32 = tpu.matmul %30, %31, %cst_15 {dimension_numbers = #tpu.dot_dimension_numbers<[1], [0], [0], [1], [0, 0, 1, 1], [], []>} : vector<1x128xf32>, vector<128x128xf32>, vector<1x128xf32> -> vector<1x128xf32>
    %33 = arith.addf %32, %14 : vector<1x128xf32>
    %c256 = arith.constant 256 : index
    %c0_16 = arith.constant 0 : index
    %34 = vector.load %arg4[%c256, %c0_16] : memref<656x128xf32, #tpu.memory_space<vmem>>, vector<128x128xf32>
    %cst_17 = arith.constant dense<0.000000e+00> : vector<1x128xf32>
    %35 = tpu.matmul %33, %34, %cst_17 {dimension_numbers = #tpu.dot_dimension_numbers<[1], [0], [0], [1], [0, 0, 1, 1], [], []>} : vector<1x128xf32>, vector<128x128xf32>, vector<1x128xf32> -> vector<1x128xf32>
    %c0_18 = arith.constant 0 : index
    %c0_19 = arith.constant 0 : index
    %36 = vector.load %arg3[%c0_18, %c0_19] : memref<1x4xf32, #tpu.memory_space<vmem>>, vector<1x4xf32>
    %c384 = arith.constant 384 : index
    %c0_20 = arith.constant 0 : index
    %37 = vector.load %arg4[%c384, %c0_20] : memref<656x128xf32, #tpu.memory_space<vmem>>, vector<4x128xf32>
    %cst_21 = arith.constant dense<0.000000e+00> : vector<1x128xf32>
    %38 = tpu.matmul %36, %37, %cst_21 {dimension_numbers = #tpu.dot_dimension_numbers<[1], [0], [0], [1], [0, 0, 1, 1], [], []>} : vector<1x4xf32>, vector<4x128xf32>, vector<1x128xf32> -> vector<1x128xf32>
    %39 = arith.addf %35, %38 : vector<1x128xf32>
    %40 = arith.addf %39, %15 : vector<1x128xf32>
    %cst_22 = arith.constant 0.000000e+00 : f32
    %41 = vector.broadcast %cst_22 : f32 to vector<1x128xf32>
    %42 = arith.maximumf %40, %41 : vector<1x128xf32>
    %c392 = arith.constant 392 : index
    %c0_23 = arith.constant 0 : index
    %43 = vector.load %arg4[%c392, %c0_23] : memref<656x128xf32, #tpu.memory_space<vmem>>, vector<128x128xf32>
    %cst_24 = arith.constant dense<0.000000e+00> : vector<1x128xf32>
    %44 = tpu.matmul %42, %43, %cst_24 {dimension_numbers = #tpu.dot_dimension_numbers<[1], [0], [0], [1], [0, 0, 1, 1], [], []>} : vector<1x128xf32>, vector<128x128xf32>, vector<1x128xf32> -> vector<1x128xf32>
    %45 = arith.addf %44, %16 : vector<1x128xf32>
    %cst_25 = arith.constant 0.000000e+00 : f32
    %46 = vector.broadcast %cst_25 : f32 to vector<1x128xf32>
    %47 = arith.maximumf %45, %46 : vector<1x128xf32>
    %c520 = arith.constant 520 : index
    %c0_26 = arith.constant 0 : index
    %48 = vector.load %arg4[%c520, %c0_26] : memref<656x128xf32, #tpu.memory_space<vmem>>, vector<128x128xf32>
    %cst_27 = arith.constant dense<0.000000e+00> : vector<1x128xf32>
    %49 = tpu.matmul %47, %48, %cst_27 {dimension_numbers = #tpu.dot_dimension_numbers<[1], [0], [0], [1], [0, 0, 1, 1], [], []>} : vector<1x128xf32>, vector<128x128xf32>, vector<1x128xf32> -> vector<1x128xf32>
    %50 = arith.addf %49, %17 : vector<1x128xf32>
    %51 = tpu.iota {dimensions = array<i32: 1>} : vector<1x128xi32>
    %c0_i32 = arith.constant 0 : i32
    %52 = vector.broadcast %c0_i32 : i32 to vector<1x128xi32>
    %53 = arith.cmpi eq, %51, %52 : vector<1x128xi32>
    %54 = arith.negf %50 : vector<1x128xf32>
    %55 = math.exp %54 : vector<1x128xf32>
    %cst_28 = arith.constant 1.000000e+00 : f32
    %56 = vector.broadcast %cst_28 : f32 to vector<1x128xf32>
    %57 = arith.addf %56, %55 : vector<1x128xf32>
    %58 = arith.divf %56, %57 : vector<1x128xf32>
    %59 = arith.select %53, %58, %50 : vector<1x128xi1>, vector<1x128xf32>
    %60 = tpu.concatenate %33, %59 in 0 : vector<1x128xf32>, vector<1x128xf32> -> vector<2x128xf32>
    %c0_29 = arith.constant 0 : index
    %c0_30 = arith.constant 0 : index
    %61 = vector.load %arg5[%c0_29, %c0_30] : memref<2x128xf32, #tpu.memory_space<vmem>>, vector<2x128xf32>
    tpu.vector_store %arg5[%c0_29, %c0_30], %60 {strides = array<i32>} : memref<2x128xf32, #tpu.memory_space<vmem>>, vector<2x128xf32>,
    return
  }
}

</mosaic_0001>

<llo_original>
// kernel: tpu_custom_call.1
$region0: #{tpu_custom_call.1}
  #allocation0 [shape = 'u32[]', space=smem, size = 0x4, offset = 0x4, fixed_abs, tag = 'smem constant byte address 0x4 - core index']
  #allocation1 [shape = 'u32[144,128]{1,0:T(1,128)}', space=vmem, size = 0x12000, scoped, tag = 'internal scratch']
  %s0 = inlined_call_operand.vmem [shape: s32[8,1], index: 0, kind: input, shape index: {}]
  %s1 = inlined_call_operand.hbm [shape: f32[16,32], index: 1, kind: input, shape index: {}]
  %s2 = inlined_call_operand.vmem [shape: f32[16,32], index: 2, kind: input, shape index: {}]
  %s3 = inlined_call_operand.vmem [shape: f32[1,4], index: 3, kind: input, shape index: {}]
  %s4 = inlined_call_operand.hbm [shape: f32[656,128], index: 4, kind: input, shape index: {}]
  %s5 = inlined_call_operand.hbm [shape: f32[2,128], index: 5, kind: output, shape index: {}]
  %s6 = sld [smem:[#allocation0]]
  $region38: #{tpu_custom_call.1} parent=0
    _
  %s8 = ssub.s32 1, %s6
  %s9 = scalar_select 0, %s8, %s6
  $region1: #{tpu_custom_call.1} parent=0
    #allocation2 [shape = 'u8[8192]{0}', space=vmem, size = 0x2000, scoped, tag = 'input window, operand 1, single buffered']
    #allocation3 [shape = 's32[1]{0}', space=sflag, size = 0x4, scoped, tag = 'scoped memory for tpu_custom_call.1']
    #allocation4 [shape = 's32[1]{0}', space=sflag, size = 0x4, scoped, tag = 'scoped memory for tpu_custom_call.1']
    #allocation5 [shape = 'u8[335872]{0}', space=vmem, size = 0x52000, scoped, tag = 'input window, operand 4, single buffered']
    #allocation6 [shape = 's32[1]{0}', space=sflag, size = 0x4, scoped, tag = 'scoped memory for tpu_custom_call.1']
    #allocation7 [shape = 'u8[1024]{0}', space=vmem, size = 0x400, scoped, tag = 'output window, operand 0, single buffered']
    %10 = vsyncpa [#allocation3], 0
    %11 = vsyncpa [#allocation6], 0
    %12 = vsyncpa [#allocation4], 0
    // Predicated region
    $region2: #{tpu_custom_call.1} parent=1 // pred_check
      _
    $region3: #{tpu_custom_call.1} parent=1 // pred_check_branch
      %14 = sbr.rel (0) target = $region5
    $region4: #{tpu_custom_call.1} parent=1 // pred_region
      _
    $region5: #{tpu_custom_call.1} parent=1 // pred_fallthru
      _
    // Predicated region
    $region6: #{tpu_custom_call.1} parent=1 // pred_check
      _
    $region7: #{tpu_custom_call.1} parent=1 // pred_check_branch
      %16 = sbr.rel (0) target = $region9
    $region8: #{tpu_custom_call.1} parent=1 // pred_region
      %s18 = ssub.s32 256, 256
      %19 = vsyncadd [#allocation3], %s18
      %s20 = sshll.u32 [#allocation2], 4
      %s21 = int_to_ptr.vmem [resolvable:$true] %s20
      %26 = dma.hbm_to_vmem [thread:$0]  %s1, 256, %s21, [#allocation3], 128, 128, 8
    $region9: #{tpu_custom_call.1} parent=1 // pred_fallthru
      _
    // Predicated region
    $region10: #{tpu_custom_call.1} parent=1 // pred_check
      _
    $region11: #{tpu_custom_call.1} parent=1 // pred_check_branch
      %28 = sbr.rel (0) target = $region13
    $region12: #{tpu_custom_call.1} parent=1 // pred_region
      _
    $region13: #{tpu_custom_call.1} parent=1 // pred_fallthru
      _
    // Predicated region
    $region14: #{tpu_custom_call.1} parent=1 // pred_check
      _
    $region15: #{tpu_custom_call.1} parent=1 // pred_check_branch
      %30 = sbr.rel (0) target = $region17
    $region16: #{tpu_custom_call.1} parent=1 // pred_region
      _
    $region17: #{tpu_custom_call.1} parent=1 // pred_fallthru
      _
    // Predicated region
    $region18: #{tpu_custom_call.1} parent=1 // pred_check
      _
    $region19: #{tpu_custom_call.1} parent=1 // pred_check_branch
      %32 = sbr.rel (0) target = $region21
    $region20: #{tpu_custom_call.1} parent=1 // pred_region
      %s34 = ssub.s32 10496, 10496
      %35 = vsyncadd [#allocation6], %s34
      %s36 = sshll.u32 [#allocation5], 4
      %s37 = int_to_ptr.vmem [resolvable:$true] %s36
      %42 = dma.hbm_to_vmem [thread:$0]  %s4, 10496, %s37, [#allocation6], 128, 128, 8
    $region21: #{tpu_custom_call.1} parent=1 // pred_fallthru
      _
    // Predicated region
    $region22: #{tpu_custom_call.1} parent=1 // pred_check
      _
    $region23: #{tpu_custom_call.1} parent=1 // pred_check_branch
      %44 = sbr.rel (0) target = $region25
    $region24: #{tpu_custom_call.1} parent=1 // pred_region
      %45 = dma.done [#allocation3], 256
    $region25: #{tpu_custom_call.1} parent=1 // pred_fallthru
      _
    // Predicated region
    $region26: #{tpu_custom_call.1} parent=1 // pred_check
      _
    $region27: #{tpu_custom_call.1} parent=1 // pred_check_branch
      %47 = sbr.rel (0) target = $region29
    $region28: #{tpu_custom_call.1} parent=1 // pred_region
      %48 = dma.done [#allocation6], 10496
    $region29: #{tpu_custom_call.1} parent=1 // pred_fallthru
      _
    %v49 = vlaneseq
    %v50 = vand.u32 %v49, 127
    %v51 = vld [vmem:[%s0] sm:$0xff]
    %52 = vset.pattern.permute.xlu0 0
    %53 = vperm.xlu0 %52, %v51
    %v54 = vpop.permute.xlu0 %53
    %vm55 = vcmp.eq.s32.totalorder %v54, %v50
    %v56 = vsel %vm55, 1, 0
    %v57 = vcvt.s32.f32 %v56
    %v58 = vld [vmem:[#allocation2] sm:$0xff]
    %v59 = vld [vmem:[#allocation2 + $0x8] sm:$0xff]
    %v60 = vld [vmem:[%s2] sm:$0xff]
    %v61 = vld [vmem:[%s2 + $0x8] sm:$0xff]
    %64 = vrot.lane.b32.xlu0 %v60, 32
    %v65 = vpop.permute.xlu0 %64
    %66 = vrot.lane.b32.xlu0 %v61, 32
    %v67 = vpop.permute.xlu0 %66
    %vm70 = vcmask 261120
    %v71 = vsel %vm70, %v58, %v65
    %v72 = vsel %vm70, %v59, %v67
    %vm73 = vcmask 130048
    %v75 = vsel %vm73, %v57, 0
    %77 = vmatprep.subr.mxu0 0.0
    %78 = vmatpush1.msra.mxu0 %v71
    %79 = vmatprep.subr.mxu0 0.0
    %80 = vmatpush1.msra.mxu0 %v72
    %81 = vmatprep.subr.mxu0 0.0
    %82 = vmatpush1.msra.mxu0 0.0
    %83 = vmatprep.subr.mxu0 0.0
    %84 = vmatpush1.msra.mxu0 0.0
    %85 = vmatprep.subr.mxu0 0.0
    %86 = vmatpush1.msra.mxu0 0.0
    %87 = vmatprep.subr.mxu0 0.0
    %88 = vmatpush1.msra.mxu0 0.0
    %89 = vmatprep.subr.mxu0 0.0
    %90 = vmatpush1.msra.mxu0 0.0
    %91 = vmatprep.subr.mxu0 0.0
    %92 = vmatpush1.msra.mxu0 0.0
    %93 = vmatprep.subr.mxu0 0.0
    %94 = vmatpush1.msra.mxu0 0.0
    %95 = vmatprep.subr.mxu0 0.0
    %96 = vmatpush1.msra.mxu0 0.0
    %97 = vmatprep.subr.mxu0 0.0
    %98 = vmatpush1.msra.mxu0 0.0
    %99 = vmatprep.subr.mxu0 0.0
    %100 = vmatpush1.msra.mxu0 0.0
    %101 = vmatprep.subr.mxu0 0.0
    %102 = vmatpush1.msra.mxu0 0.0
    %103 = vmatprep.subr.mxu0 0.0
    %104 = vmatpush1.msra.mxu0 0.0
    %105 = vmatprep.subr.mxu0 0.0
    %106 = vmatpush1.msra.mxu0 0.0
    %107 = vmatprep.subr.mxu0 0.0
    %108 = vmatpush1.msra.mxu0 0.0
    %109 = vmatprep.subr.mxu0 0.0
    %110 = vmatpush1.msra.mxu0 0.0
    %111 = vmatprep.subr.mxu0 0.0
    %112 = vmatpush1.msra.mxu0 0.0
    %113 = vmatprep.subr.mxu0 0.0
    %114 = vmatpush1.msra.mxu0 0.0
    %115 = vmatprep.subr.mxu0 0.0
    %116 = vmatpush1.msra.mxu0 0.0
    %117 = vmatprep.subr.mxu0 0.0
    %118 = vmatpush1.msra.mxu0 0.0
    %119 = vmatprep.subr.mxu0 0.0
    %120 = vmatpush1.msra.mxu0 0.0
    %121 = vmatprep.subr.mxu0 0.0
    %122 = vmatpush1.msra.mxu0 0.0
    %123 = vmatprep.subr.mxu0 0.0
    %124 = vmatpush1.msra.mxu0 0.0
    %125 = vmatprep.subr.mxu0 0.0
    %126 = vmatpush1.msra.mxu0 0.0
    %127 = vmatprep.subr.mxu0 0.0
    %128 = vmatpush1.msra.mxu0 0.0
    %129 = vmatprep.subr.mxu0 0.0
    %130 = vmatpush1.msra.mxu0 0.0
    %131 = vmatprep.subr.mxu0 0.0
    %132 = vmatpush1.msra.mxu0 0.0
    %133 = vmatprep.subr.mxu0 0.0
    %134 = vmatpush1.msra.mxu0 0.0
    %135 = vmatprep.subr.mxu0 0.0
    %136 = vmatpush1.msra.mxu0 0.0
    %137 = vmatprep.subr.mxu0 0.0
    %138 = vmatpush1.msra.mxu0 0.0
    %139 = vmatprep.subr.mxu0 0.0
    %140 = vmatpush1.msra.mxu0 0.0
    %141 = vmatprep.mubr.f32.mxu0 0.0
    %142 = vmatmul.mubr.f32.gmra.mrb[0].mxu0 %v75
    %v143 = vpop.f32.mrb[0].mxu0
    %v144 = vadd.f32 0.0, %v143
    %v145 = vpop.f32.mrb[0].mxu0
    %146 = vdwg.mxu0
    %v147 = vld [vmem:[#allocation5 + $0x288] sm:$0xff]
    %v148 = vld [vmem:[#allocation5] sm:$0xff]
    %v149 = vld [vmem:[#allocation5 + $0x8] sm:$0xff]
    %v150 = vld [vmem:[#allocation5 + $0x10] sm:$0xff]
    %v151 = vld [vmem:[#allocation5 + $0x18] sm:$0xff]
    %v152 = vld [vmem:[#allocation5 + $0x20] sm:$0xff]
    %v153 = vld [vmem:[#allocation5 + $0x28] sm:$0xff]
    %v154 = vld [vmem:[#allocation5 + $0x30] sm:$0xff]
    %v155 = vld [vmem:[#allocation5 + $0x38] sm:$0xff]
    %v156 = vld [vmem:[#allocation5 + $0x40] sm:$0xff]
    %v157 = vld [vmem:[#allocation5 + $0x48] sm:$0xff]
    %v158 = vld [vmem:[#allocation5 + $0x50] sm:$0xff]
    %v159 = vld [vmem:[#allocation5 + $0x58] sm:$0xff]
    %v160 = vld [vmem:[#allocation5 + $0x60] sm:$0xff]
    %v161 = vld [vmem:[#allocation5 + $0x68] sm:$0xff]
    %v162 = vld [vmem:[#allocation5 + $0x70] sm:$0xff]
    %v163 = vld [vmem:[#allocation5 + $0x78] sm:$0xff]
    %v165 = vrot.slane %v144, 4
    %vm166 = vcmask 523264
    %v167 = vsel %vm166, %v165, 0
    %169 = vmatprep.subr.mxu0 0.0
    %170 = vmatpush1.msra.mxu0 %v156
    %171 = vmatprep.subr.mxu0 0.0
    %172 = vmatpush1.msra.mxu0 %v157
    %173 = vmatprep.subr.mxu0 0.0
    %174 = vmatpush1.msra.mxu0 %v158
    %175 = vmatprep.subr.mxu0 0.0
    %176 = vmatpush1.msra.mxu0 %v159
    %177 = vmatprep.subr.mxu0 0.0
    %178 = vmatpush1.msra.mxu0 %v160
    %179 = vmatprep.subr.mxu0 0.0
    %180 = vmatpush1.msra.mxu0 %v161
    %181 = vmatprep.subr.mxu0 0.0
    %182 = vmatpush1.msra.mxu0 %v162
    %183 = vmatprep.subr.mxu0 0.0
    %184 = vmatpush1.msra.mxu0 %v163
    %185 = vmatprep.subr.mxu0 0.0
    %186 = vmatpush1.msra.mxu0 0.0
    %187 = vmatprep.subr.mxu0 0.0
    %188 = vmatpush1.msra.mxu0 0.0
    %189 = vmatprep.subr.mxu0 0.0
    %190 = vmatpush1.msra.mxu0 0.0
    %191 = vmatprep.subr.mxu0 0.0
    %192 = vmatpush1.msra.mxu0 0.0
    %193 = vmatprep.subr.mxu0 0.0
    %194 = vmatpush1.msra.mxu0 0.0
    %195 = vmatprep.subr.mxu0 0.0
    %196 = vmatpush1.msra.mxu0 0.0
    %197 = vmatprep.subr.mxu0 0.0
    %198 = vmatpush1.msra.mxu0 0.0
    %199 = vmatprep.subr.mxu0 0.0
    %200 = vmatpush1.msra.mxu0 0.0
    %201 = vmatprep.subr.mxu0 0.0
    %202 = vmatpush1.msra.mxu0 0.0
    %203 = vmatprep.subr.mxu0 0.0
    %204 = vmatpush1.msra.mxu0 0.0
    %205 = vmatprep.subr.mxu0 0.0
    %206 = vmatpush1.msra.mxu0 0.0
    %207 = vmatprep.subr.mxu0 0.0
    %208 = vmatpush1.msra.mxu0 0.0
    %209 = vmatprep.subr.mxu0 0.0
    %210 = vmatpush1.msra.mxu0 0.0
    %211 = vmatprep.subr.mxu0 0.0
    %212 = vmatpush1.msra.mxu0 0.0
    %213 = vmatprep.subr.mxu0 0.0
    %214 = vmatpush1.msra.mxu0 0.0
    %215 = vmatprep.subr.mxu0 0.0
    %216 = vmatpush1.msra.mxu0 0.0
    %217 = vmatprep.subr.mxu0 0.0
    %218 = vmatpush1.msra.mxu0 0.0
    %219 = vmatprep.subr.mxu0 0.0
    %220 = vmatpush1.msra.mxu0 0.0
    %221 = vmatprep.subr.mxu0 0.0
    %222 = vmatpush1.msra.mxu0 0.0
    %223 = vmatprep.subr.mxu0 0.0
    %224 = vmatpush1.msra.mxu0 0.0
    %225 = vmatprep.subr.mxu0 0.0
    %226 = vmatpush1.msra.mxu0 0.0
    %227 = vmatprep.subr.mxu0 0.0
    %228 = vmatpush1.msra.mxu0 0.0
    %229 = vmatprep.subr.mxu0 0.0
    %230 = vmatpush1.msra.mxu0 0.0
    %231 = vmatprep.subr.mxu0 0.0
    %232 = vmatpush1.msra.mxu0 0.0
    %233 = vmatprep.mubr.f32.mxu0 0.0
    %234 = vmatmul.mubr.f32.gmra.mrb[0].mxu0 %v167
    %v235 = vpop.f32.mrb[0].mxu0
    %v236 = vadd.f32 0.0, %v235
    %v237 = vpop.f32.mrb[0].mxu0
    %238 = vdwg.mxu0
    %v239 = vsel %vm166, %v144, 0
    %241 = vmatprep.subr.mxu0 0.0
    %242 = vmatpush1.msra.mxu0 %v148
    %243 = vmatprep.subr.mxu0 0.0
    %244 = vmatpush1.msra.mxu0 %v149
    %245 = vmatprep.subr.mxu0 0.0
    %246 = vmatpush1.msra.mxu0 %v150
    %247 = vmatprep.subr.mxu0 0.0
    %248 = vmatpush1.msra.mxu0 %v151
    %249 = vmatprep.subr.mxu0 0.0
    %250 = vmatpush1.msra.mxu0 %v152
    %251 = vmatprep.subr.mxu0 0.0
    %252 = vmatpush1.msra.mxu0 %v153
    %253 = vmatprep.subr.mxu0 0.0
    %254 = vmatpush1.msra.mxu0 %v154
    %255 = vmatprep.subr.mxu0 0.0
    %256 = vmatpush1.msra.mxu0 %v155
    %257 = vmatprep.subr.mxu0 0.0
    %258 = vmatpush1.msra.mxu0 0.0
    %259 = vmatprep.subr.mxu0 0.0
    %260 = vmatpush1.msra.mxu0 0.0
    %261 = vmatprep.subr.mxu0 0.0
    %262 = vmatpush1.msra.mxu0 0.0
    %263 = vmatprep.subr.mxu0 0.0
    %264 = vmatpush1.msra.mxu0 0.0
    %265 = vmatprep.subr.mxu0 0.0
    %266 = vmatpush1.msra.mxu0 0.0
    %267 = vmatprep.subr.mxu0 0.0
    %268 = vmatpush1.msra.mxu0 0.0
    %269 = vmatprep.subr.mxu0 0.0
    %270 = vmatpush1.msra.mxu0 0.0
    %271 = vmatprep.subr.mxu0 0.0
    %272 = vmatpush1.msra.mxu0 0.0
    %273 = vmatprep.subr.mxu0 0.0
    %274 = vmatpush1.msra.mxu0 0.0
    %275 = vmatprep.subr.mxu0 0.0
    %276 = vmatpush1.msra.mxu0 0.0
    %277 = vmatprep.subr.mxu0 0.0
    %278 = vmatpush1.msra.mxu0 0.0
    %279 = vmatprep.subr.mxu0 0.0
    %280 = vmatpush1.msra.mxu0 0.0
    %281 = vmatprep.subr.mxu0 0.0
    %282 = vmatpush1.msra.mxu0 0.0
    %283 = vmatprep.subr.mxu0 0.0
    %284 = vmatpush1.msra.mxu0 0.0
    %285 = vmatprep.subr.mxu0 0.0
    %286 = vmatpush1.msra.mxu0 0.0
    %287 = vmatprep.subr.mxu0 0.0
    %288 = vmatpush1.msra.mxu0 0.0
    %289 = vmatprep.subr.mxu0 0.0
    %290 = vmatpush1.msra.mxu0 0.0
    %291 = vmatprep.subr.mxu0 0.0
    %292 = vmatpush1.msra.mxu0 0.0
    %293 = vmatprep.subr.mxu0 0.0
    %294 = vmatpush1.msra.mxu0 0.0
    %295 = vmatprep.subr.mxu0 0.0
    %296 = vmatpush1.msra.mxu0 0.0
    %297 = vmatprep.subr.mxu0 0.0
    %298 = vmatpush1.msra.mxu0 0.0
    %299 = vmatprep.subr.mxu0 0.0
    %300 = vmatpush1.msra.mxu0 0.0
    %301 = vmatprep.subr.mxu0 0.0
    %302 = vmatpush1.msra.mxu0 0.0
    %303 = vmatprep.subr.mxu0 0.0
    %304 = vmatpush1.msra.mxu0 0.0
    %305 = vmatprep.mubr.f32.mxu0 0.0
    %306 = vmatmul.mubr.f32.gmra.mrb[0].mxu0 %v239
    %v307 = vpop.f32.mrb[0].mxu0
    %v308 = vadd.f32 %v236, %v307
    %v309 = vpop.f32.mrb[0].mxu0
    %310 = vdwg.mxu0
    %v311 = vlaneseq
    %v312 = vshrl.u32 %v311, 7
    %v313 = vsub.s32 0, %v312
    %v314 = vrot.slane %v147, %v313
    %v315 = vadd.f32 %v308, %v314
    %v316 = vmax.f32 %v315, 0.0
    %vm317 = vcmask 1043456
    %v318 = vsel %vm317, %v316, 0.0
    %v319 = vrot.slane %v318, 4
    %v320 = vadd.f32 %v318, %v319
    %v321 = vrot.slane %v320, 2
    %v322 = vadd.f32 %v320, %v321
    %v323 = vrot.slane %v322, 1
    %v324 = vadd.f32 %v322, %v323
    %v325 = vrcp.pop 4.0
    %v326 = vmul.f32 %v324, %v325
    %v327 = vld [vmem:[#allocation5 + $0x80] sm:$0xff]
    %v328 = vld [vmem:[#allocation5 + $0x88] sm:$0xff]
    %v329 = vld [vmem:[#allocation5 + $0x90] sm:$0xff]
    %v330 = vld [vmem:[#allocation5 + $0x98] sm:$0xff]
    %v331 = vld [vmem:[#allocation5 + $0xa0] sm:$0xff]
    %v332 = vld [vmem:[#allocation5 + $0xa8] sm:$0xff]
    %v333 = vld [vmem:[#allocation5 + $0xb0] sm:$0xff]
    %v334 = vld [vmem:[#allocation5 + $0xb8] sm:$0xff]
    %v335 = vld [vmem:[#allocation5 + $0xc0] sm:$0xff]
    %v336 = vld [vmem:[#allocation5 + $0xc8] sm:$0xff]
    %v337 = vld [vmem:[#allocation5 + $0xd0] sm:$0xff]
    %v338 = vld [vmem:[#allocation5 + $0xd8] sm:$0xff]
    %v339 = vld [vmem:[#allocation5 + $0xe0] sm:$0xff]
    %v340 = vld [vmem:[#allocation5 + $0xe8] sm:$0xff]
    %v341 = vld [vmem:[#allocation5 + $0xf0] sm:$0xff]
    %v342 = vld [vmem:[#allocation5 + $0xf8] sm:$0xff]
    %v344 = vrot.slane %v147, 1
    %346 = vmatprep.subr.mxu0 0.0
    %347 = vmatpush1.msra.mxu0 %v327
    %348 = vmatprep.subr.mxu0 0.0
    %349 = vmatpush1.msra.mxu0 %v328
    %350 = vmatprep.subr.mxu0 0.0
    %351 = vmatpush1.msra.mxu0 %v329
    %352 = vmatprep.subr.mxu0 0.0
    %353 = vmatpush1.msra.mxu0 %v330
    %354 = vmatprep.subr.mxu0 0.0
    %355 = vmatpush1.msra.mxu0 %v331
    %356 = vmatprep.subr.mxu0 0.0
    %357 = vmatpush1.msra.mxu0 %v332
    %358 = vmatprep.subr.mxu0 0.0
    %359 = vmatpush1.msra.mxu0 %v333
    %360 = vmatprep.subr.mxu0 0.0
    %361 = vmatpush1.msra.mxu0 %v334
    %362 = vmatprep.subr.mxu0 0.0
    %363 = vmatpush1.msra.mxu0 %v335
    %364 = vmatprep.subr.mxu0 0.0
    %365 = vmatpush1.msra.mxu0 %v336
    %366 = vmatprep.subr.mxu0 0.0
    %367 = vmatpush1.msra.mxu0 %v337
    %368 = vmatprep.subr.mxu0 0.0
    %369 = vmatpush1.msra.mxu0 %v338
    %370 = vmatprep.subr.mxu0 0.0
    %371 = vmatpush1.msra.mxu0 %v339
    %372 = vmatprep.subr.mxu0 0.0
    %373 = vmatpush1.msra.mxu0 %v340
    %374 = vmatprep.subr.mxu0 0.0
    %375 = vmatpush1.msra.mxu0 %v341
    %376 = vmatprep.subr.mxu0 0.0
    %377 = vmatpush1.msra.mxu0 %v342
    %378 = vmatprep.subr.mxu0 0.0
    %379 = vmatpush1.msra.mxu0 0.0
    %380 = vmatprep.subr.mxu0 0.0
    %381 = vmatpush1.msra.mxu0 0.0
    %382 = vmatprep.subr.mxu0 0.0
    %383 = vmatpush1.msra.mxu0 0.0
    %384 = vmatprep.subr.mxu0 0.0
    %385 = vmatpush1.msra.mxu0 0.0
    %386 = vmatprep.subr.mxu0 0.0
    %387 = vmatpush1.msra.mxu0 0.0
    %388 = vmatprep.subr.mxu0 0.0
    %389 = vmatpush1.msra.mxu0 0.0
    %390 = vmatprep.subr.mxu0 0.0
    %391 = vmatpush1.msra.mxu0 0.0
    %392 = vmatprep.subr.mxu0 0.0
    %393 = vmatpush1.msra.mxu0 0.0
    %394 = vmatprep.subr.mxu0 0.0
    %395 = vmatpush1.msra.mxu0 0.0
    %396 = vmatprep.subr.mxu0 0.0
    %397 = vmatpush1.msra.mxu0 0.0
    %398 = vmatprep.subr.mxu0 0.0
    %399 = vmatpush1.msra.mxu0 0.0
    %400 = vmatprep.subr.mxu0 0.0
    %401 = vmatpush1.msra.mxu0 0.0
    %402 = vmatprep.subr.mxu0 0.0
    %403 = vmatpush1.msra.mxu0 0.0
    %404 = vmatprep.subr.mxu0 0.0
    %405 = vmatpush1.msra.mxu0 0.0
    %406 = vmatprep.subr.mxu0 0.0
    %407 = vmatpush1.msra.mxu0 0.0
    %408 = vmatprep.subr.mxu0 0.0
    %409 = vmatpush1.msra.mxu0 0.0
    %410 = vmatprep.mubr.f32.mxu0 0.0
    %411 = vmatmul.mubr.f32.gmra.mrb[0].mxu0 %v326
    %v412 = vpop.f32.mrb[0].mxu0
    %v413 = vadd.f32 %v344, %v412
    %v414 = vpop.f32.mrb[0].mxu0
    %415 = vdwg.mxu0
    %v416 = vld [vmem:[#allocation5 + $0x100] sm:$0xff]
    %v417 = vld [vmem:[#allocation5 + $0x108] sm:$0xff]
    %v418 = vld [vmem:[#allocation5 + $0x110] sm:$0xff]
    %v419 = vld [vmem:[#allocation5 + $0x118] sm:$0xff]
    %v420 = vld [vmem:[#allocation5 + $0x120] sm:$0xff]
    %v421 = vld [vmem:[#allocation5 + $0x128] sm:$0xff]
    %v422 = vld [vmem:[#allocation5 + $0x130] sm:$0xff]
    %v423 = vld [vmem:[#allocation5 + $0x138] sm:$0xff]
    %v424 = vld [vmem:[#allocation5 + $0x140] sm:$0xff]
    %v425 = vld [vmem:[#allocation5 + $0x148] sm:$0xff]
    %v426 = vld [vmem:[#allocation5 + $0x150] sm:$0xff]
    %v427 = vld [vmem:[#allocation5 + $0x158] sm:$0xff]
    %v428 = vld [vmem:[#allocation5 + $0x160] sm:$0xff]
    %v429 = vld [vmem:[#allocation5 + $0x168] sm:$0xff]
    %v430 = vld [vmem:[#allocation5 + $0x170] sm:$0xff]
    %v431 = vld [vmem:[#allocation5 + $0x178] sm:$0xff]
    %v432 = vld [vmem:[%s3] sm:$0x1]
    %v433 = vld [vmem:[#allocation5 + $0x180] sm:$0xf]
    %vm434 = vcmask 31744
    %v436 = vsel %vm434, %v432, 0
    %v439 = vsel %vm317, %v433, 0
    %441 = vmatprep.subr.mxu0 0.0
    %442 = vmatpush1.msra.mxu0 %v439
    %443 = vmatprep.subr.mxu0 0.0
    %444 = vmatpush1.msra.mxu0 0.0
    %445 = vmatprep.subr.mxu0 0.0
    %446 = vmatpush1.msra.mxu0 0.0
    %447 = vmatprep.subr.mxu0 0.0
    %448 = vmatpush1.msra.mxu0 0.0
    %449 = vmatprep.subr.mxu0 0.0
    %450 = vmatpush1.msra.mxu0 0.0
    %451 = vmatprep.subr.mxu0 0.0
    %452 = vmatpush1.msra.mxu0 0.0
    %453 = vmatprep.subr.mxu0 0.0
    %454 = vmatpush1.msra.mxu0 0.0
    %455 = vmatprep.subr.mxu0 0.0
    %456 = vmatpush1.msra.mxu0 0.0
    %457 = vmatprep.subr.mxu0 0.0
    %458 = vmatpush1.msra.mxu0 0.0
    %459 = vmatprep.subr.mxu0 0.0
    %460 = vmatpush1.msra.mxu0 0.0
    %461 = vmatprep.subr.mxu0 0.0
    %462 = vmatpush1.msra.mxu0 0.0
    %463 = vmatprep.subr.mxu0 0.0
    %464 = vmatpush1.msra.mxu0 0.0
    %465 = vmatprep.subr.mxu0 0.0
    %466 = vmatpush1.msra.mxu0 0.0
    %467 = vmatprep.subr.mxu0 0.0
    %468 = vmatpush1.msra.mxu0 0.0
    %469 = vmatprep.subr.mxu0 0.0
    %470 = vmatpush1.msra.mxu0 0.0
    %471 = vmatprep.subr.mxu0 0.0
    %472 = vmatpush1.msra.mxu0 0.0
    %473 = vmatprep.subr.mxu0 0.0
    %474 = vmatpush1.msra.mxu0 0.0
    %475 = vmatprep.subr.mxu0 0.0
    %476 = vmatpush1.msra.mxu0 0.0
    %477 = vmatprep.subr.mxu0 0.0
    %478 = vmatpush1.msra.mxu0 0.0
    %479 = vmatprep.subr.mxu0 0.0
    %480 = vmatpush1.msra.mxu0 0.0
    %481 = vmatprep.subr.mxu0 0.0
    %482 = vmatpush1.msra.mxu0 0.0
    %483 = vmatprep.subr.mxu0 0.0
    %484 = vmatpush1.msra.mxu0 0.0
    %485 = vmatprep.subr.mxu0 0.0
    %486 = vmatpush1.msra.mxu0 0.0
    %487 = vmatprep.subr.mxu0 0.0
    %488 = vmatpush1.msra.mxu0 0.0
    %489 = vmatprep.subr.mxu0 0.0
    %490 = vmatpush1.msra.mxu0 0.0
    %491 = vmatprep.subr.mxu0 0.0
    %492 = vmatpush1.msra.mxu0 0.0
    %493 = vmatprep.subr.mxu0 0.0
    %494 = vmatpush1.msra.mxu0 0.0
    %495 = vmatprep.subr.mxu0 0.0
    %496 = vmatpush1.msra.mxu0 0.0
    %497 = vmatprep.subr.mxu0 0.0
    %498 = vmatpush1.msra.mxu0 0.0
    %499 = vmatprep.subr.mxu0 0.0
    %500 = vmatpush1.msra.mxu0 0.0
    %501 = vmatprep.subr.mxu0 0.0
    %502 = vmatpush1.msra.mxu0 0.0
    %503 = vmatprep.subr.mxu0 0.0
    %504 = vmatpush1.msra.mxu0 0.0
    %505 = vmatprep.mubr.f32.mxu0 0.0
    %506 = vmatmul.mubr.f32.gmra.mrb[0].mxu0 %v436
    %v507 = vpop.f32.mrb[0].mxu0
    %v508 = vadd.f32 0.0, %v507
    %v509 = vpop.f32.mrb[0].mxu0
    %510 = vdwg.mxu0
    %511 = vmatprep.subr.mxu0 0.0
    %512 = vmatpush1.msra.mxu0 %v416
    %513 = vmatprep.subr.mxu0 0.0
    %514 = vmatpush1.msra.mxu0 %v417
    %515 = vmatprep.subr.mxu0 0.0
    %516 = vmatpush1.msra.mxu0 %v418
    %517 = vmatprep.subr.mxu0 0.0
    %518 = vmatpush1.msra.mxu0 %v419
    %519 = vmatprep.subr.mxu0 0.0
    %520 = vmatpush1.msra.mxu0 %v420
    %521 = vmatprep.subr.mxu0 0.0
    %522 = vmatpush1.msra.mxu0 %v421
    %523 = vmatprep.subr.mxu0 0.0
    %524 = vmatpush1.msra.mxu0 %v422
    %525 = vmatprep.subr.mxu0 0.0
    %526 = vmatpush1.msra.mxu0 %v423
    %527 = vmatprep.subr.mxu0 0.0
    %528 = vmatpush1.msra.mxu0 %v424
    %529 = vmatprep.subr.mxu0 0.0
    %530 = vmatpush1.msra.mxu0 %v425
    %531 = vmatprep.subr.mxu0 0.0
    %532 = vmatpush1.msra.mxu0 %v426
    %533 = vmatprep.subr.mxu0 0.0
    %534 = vmatpush1.msra.mxu0 %v427
    %535 = vmatprep.subr.mxu0 0.0
    %536 = vmatpush1.msra.mxu0 %v428
    %537 = vmatprep.subr.mxu0 0.0
    %538 = vmatpush1.msra.mxu0 %v429
    %539 = vmatprep.subr.mxu0 0.0
    %540 = vmatpush1.msra.mxu0 %v430
    %541 = vmatprep.subr.mxu0 0.0
    %542 = vmatpush1.msra.mxu0 %v431
    %543 = vmatprep.subr.mxu0 0.0
    %544 = vmatpush1.msra.mxu0 0.0
    %545 = vmatprep.subr.mxu0 0.0
    %546 = vmatpush1.msra.mxu0 0.0
    %547 = vmatprep.subr.mxu0 0.0
    %548 = vmatpush1.msra.mxu0 0.0
    %549 = vmatprep.subr.mxu0 0.0
    %550 = vmatpush1.msra.mxu0 0.0
    %551 = vmatprep.subr.mxu0 0.0
    %552 = vmatpush1.msra.mxu0 0.0
    %553 = vmatprep.subr.mxu0 0.0
    %554 = vmatpush1.msra.mxu0 0.0
    %555 = vmatprep.subr.mxu0 0.0
    %556 = vmatpush1.msra.mxu0 0.0
    %557 = vmatprep.subr.mxu0 0.0
    %558 = vmatpush1.msra.mxu0 0.0
    %559 = vmatprep.subr.mxu0 0.0
    %560 = vmatpush1.msra.mxu0 0.0
    %561 = vmatprep.subr.mxu0 0.0
    %562 = vmatpush1.msra.mxu0 0.0
    %563 = vmatprep.subr.mxu0 0.0
    %564 = vmatpush1.msra.mxu0 0.0
    %565 = vmatprep.subr.mxu0 0.0
    %566 = vmatpush1.msra.mxu0 0.0
    %567 = vmatprep.subr.mxu0 0.0
    %568 = vmatpush1.msra.mxu0 0.0
    %569 = vmatprep.subr.mxu0 0.0
    %570 = vmatpush1.msra.mxu0 0.0
    %571 = vmatprep.subr.mxu0 0.0
    %572 = vmatpush1.msra.mxu0 0.0
    %573 = vmatprep.subr.mxu0 0.0
    %574 = vmatpush1.msra.mxu0 0.0
    %575 = vmatprep.mubr.f32.mxu0 0.0
    %576 = vmatmul.mubr.f32.gmra.mrb[0].mxu0 %v413
    %v577 = vpop.f32.mrb[0].mxu0
    %v578 = vadd.f32 %v508, %v577
    %v579 = vpop.f32.mrb[0].mxu0
    %580 = vdwg.mxu0
    %v581 = vrot.slane %v147, 2
    %v583 = vadd.f32 %v578, %v581
    %v584 = vmax.f32 %v583, 0.0
    %v585 = vld [vmem:[#allocation5 + $0x188] sm:$0xff]
    %v586 = vld [vmem:[#allocation5 + $0x190] sm:$0xff]
    %v587 = vld [vmem:[#allocation5 + $0x198] sm:$0xff]
    %v588 = vld [vmem:[#allocation5 + $0x1a0] sm:$0xff]
    %v589 = vld [vmem:[#allocation5 + $0x1a8] sm:$0xff]
    %v590 = vld [vmem:[#allocation5 + $0x1b0] sm:$0xff]
    %v591 = vld [vmem:[#allocation5 + $0x1b8] sm:$0xff]
    %v592 = vld [vmem:[#allocation5 + $0x1c0] sm:$0xff]
    %v593 = vld [vmem:[#allocation5 + $0x1c8] sm:$0xff]
    %v594 = vld [vmem:[#allocation5 + $0x1d0] sm:$0xff]
    %v595 = vld [vmem:[#allocation5 + $0x1d8] sm:$0xff]
    %v596 = vld [vmem:[#allocation5 + $0x1e0] sm:$0xff]
    %v597 = vld [vmem:[#allocation5 + $0x1e8] sm:$0xff]
    %v598 = vld [vmem:[#allocation5 + $0x1f0] sm:$0xff]
    %v599 = vld [vmem:[#allocation5 + $0x1f8] sm:$0xff]
    %v600 = vld [vmem:[#allocation5 + $0x200] sm:$0xff]
    %v601 = vrot.slane %v147, 3
    %603 = vmatprep.subr.mxu0 0.0
    %604 = vmatpush1.msra.mxu0 %v585
    %605 = vmatprep.subr.mxu0 0.0
    %606 = vmatpush1.msra.mxu0 %v586
    %607 = vmatprep.subr.mxu0 0.0
    %608 = vmatpush1.msra.mxu0 %v587
    %609 = vmatprep.subr.mxu0 0.0
    %610 = vmatpush1.msra.mxu0 %v588
    %611 = vmatprep.subr.mxu0 0.0
    %612 = vmatpush1.msra.mxu0 %v589
    %613 = vmatprep.subr.mxu0 0.0
    %614 = vmatpush1.msra.mxu0 %v590
    %615 = vmatprep.subr.mxu0 0.0
    %616 = vmatpush1.msra.mxu0 %v591
    %617 = vmatprep.subr.mxu0 0.0
    %618 = vmatpush1.msra.mxu0 %v592
    %619 = vmatprep.subr.mxu0 0.0
    %620 = vmatpush1.msra.mxu0 %v593
    %621 = vmatprep.subr.mxu0 0.0
    %622 = vmatpush1.msra.mxu0 %v594
    %623 = vmatprep.subr.mxu0 0.0
    %624 = vmatpush1.msra.mxu0 %v595
    %625 = vmatprep.subr.mxu0 0.0
    %626 = vmatpush1.msra.mxu0 %v596
    %627 = vmatprep.subr.mxu0 0.0
    %628 = vmatpush1.msra.mxu0 %v597
    %629 = vmatprep.subr.mxu0 0.0
    %630 = vmatpush1.msra.mxu0 %v598
    %631 = vmatprep.subr.mxu0 0.0
    %632 = vmatpush1.msra.mxu0 %v599
    %633 = vmatprep.subr.mxu0 0.0
    %634 = vmatpush1.msra.mxu0 %v600
    %635 = vmatprep.subr.mxu0 0.0
    %636 = vmatpush1.msra.mxu0 0.0
    %637 = vmatprep.subr.mxu0 0.0
    %638 = vmatpush1.msra.mxu0 0.0
    %639 = vmatprep.subr.mxu0 0.0
    %640 = vmatpush1.msra.mxu0 0.0
    %641 = vmatprep.subr.mxu0 0.0
    %642 = vmatpush1.msra.mxu0 0.0
    %643 = vmatprep.subr.mxu0 0.0
    %644 = vmatpush1.msra.mxu0 0.0
    %645 = vmatprep.subr.mxu0 0.0
    %646 = vmatpush1.msra.mxu0 0.0
    %647 = vmatprep.subr.mxu0 0.0
    %648 = vmatpush1.msra.mxu0 0.0
    %649 = vmatprep.subr.mxu0 0.0
    %650 = vmatpush1.msra.mxu0 0.0
    %651 = vmatprep.subr.mxu0 0.0
    %652 = vmatpush1.msra.mxu0 0.0
    %653 = vmatprep.subr.mxu0 0.0
    %654 = vmatpush1.msra.mxu0 0.0
    %655 = vmatprep.subr.mxu0 0.0
    %656 = vmatpush1.msra.mxu0 0.0
    %657 = vmatprep.subr.mxu0 0.0
    %658 = vmatpush1.msra.mxu0 0.0
    %659 = vmatprep.subr.mxu0 0.0
    %660 = vmatpush1.msra.mxu0 0.0
    %661 = vmatprep.subr.mxu0 0.0
    %662 = vmatpush1.msra.mxu0 0.0
    %663 = vmatprep.subr.mxu0 0.0
    %664 = vmatpush1.msra.mxu0 0.0
    %665 = vmatprep.subr.mxu0 0.0
    %666 = vmatpush1.msra.mxu0 0.0
    %667 = vmatprep.mubr.f32.mxu0 0.0
    %668 = vmatmul.mubr.f32.gmra.mrb[0].mxu0 %v584
    %v669 = vpop.f32.mrb[0].mxu0
    %v670 = vadd.f32 %v601, %v669
    %v671 = vpop.f32.mrb[0].mxu0
    %672 = vdwg.mxu0
    %v673 = vmax.f32 %v670, 0.0
    %v674 = vld [vmem:[#allocation5 + $0x208] sm:$0xff]
    %v675 = vld [vmem:[#allocation5 + $0x210] sm:$0xff]
    %v676 = vld [vmem:[#allocation5 + $0x218] sm:$0xff]
    %v677 = vld [vmem:[#allocation5 + $0x220] sm:$0xff]
    %v678 = vld [vmem:[#allocation5 + $0x228] sm:$0xff]
    %v679 = vld [vmem:[#allocation5 + $0x230] sm:$0xff]
    %v680 = vld [vmem:[#allocation5 + $0x238] sm:$0xff]
    %v681 = vld [vmem:[#allocation5 + $0x240] sm:$0xff]
    %v682 = vld [vmem:[#allocation5 + $0x248] sm:$0xff]
    %v683 = vld [vmem:[#allocation5 + $0x250] sm:$0xff]
    %v684 = vld [vmem:[#allocation5 + $0x258] sm:$0xff]
    %v685 = vld [vmem:[#allocation5 + $0x260] sm:$0xff]
    %v686 = vld [vmem:[#allocation5 + $0x268] sm:$0xff]
    %v687 = vld [vmem:[#allocation5 + $0x270] sm:$0xff]
    %v688 = vld [vmem:[#allocation5 + $0x278] sm:$0xff]
    %v689 = vld [vmem:[#allocation5 + $0x280] sm:$0xff]
    %v690 = vrot.slane %v147, 4
    %692 = vmatprep.subr.mxu0 0.0
    %693 = vmatpush1.msra.mxu0 %v674
    %694 = vmatprep.subr.mxu0 0.0
    %695 = vmatpush1.msra.mxu0 %v675
    %696 = vmatprep.subr.mxu0 0.0
    %697 = vmatpush1.msra.mxu0 %v676
    %698 = vmatprep.subr.mxu0 0.0
    %699 = vmatpush1.msra.mxu0 %v677
    %700 = vmatprep.subr.mxu0 0.0
    %701 = vmatpush1.msra.mxu0 %v678
    %702 = vmatprep.subr.mxu0 0.0
    %703 = vmatpush1.msra.mxu0 %v679
    %704 = vmatprep.subr.mxu0 0.0
    %705 = vmatpush1.msra.mxu0 %v680
    %706 = vmatprep.subr.mxu0 0.0
    %707 = vmatpush1.msra.mxu0 %v681
    %708 = vmatprep.subr.mxu0 0.0
    %709 = vmatpush1.msra.mxu0 %v682
    %710 = vmatprep.subr.mxu0 0.0
    %711 = vmatpush1.msra.mxu0 %v683
    %712 = vmatprep.subr.mxu0 0.0
    %713 = vmatpush1.msra.mxu0 %v684
    %714 = vmatprep.subr.mxu0 0.0
    %715 = vmatpush1.msra.mxu0 %v685
    %716 = vmatprep.subr.mxu0 0.0
    %717 = vmatpush1.msra.mxu0 %v686
    %718 = vmatprep.subr.mxu0 0.0
    %719 = vmatpush1.msra.mxu0 %v687
    %720 = vmatprep.subr.mxu0 0.0
    %721 = vmatpush1.msra.mxu0 %v688
    %722 = vmatprep.subr.mxu0 0.0
    %723 = vmatpush1.msra.mxu0 %v689
    %724 = vmatprep.subr.mxu0 0.0
    %725 = vmatpush1.msra.mxu0 0.0
    %726 = vmatprep.subr.mxu0 0.0
    %727 = vmatpush1.msra.mxu0 0.0
    %728 = vmatprep.subr.mxu0 0.0
    %729 = vmatpush1.msra.mxu0 0.0
    %730 = vmatprep.subr.mxu0 0.0
    %731 = vmatpush1.msra.mxu0 0.0
    %732 = vmatprep.subr.mxu0 0.0
    %733 = vmatpush1.msra.mxu0 0.0
    %734 = vmatprep.subr.mxu0 0.0
    %735 = vmatpush1.msra.mxu0 0.0
    %736 = vmatprep.subr.mxu0 0.0
    %737 = vmatpush1.msra.mxu0 0.0
    %738 = vmatprep.subr.mxu0 0.0
    %739 = vmatpush1.msra.mxu0 0.0
    %740 = vmatprep.subr.mxu0 0.0
    %741 = vmatpush1.msra.mxu0 0.0
    %742 = vmatprep.subr.mxu0 0.0
    %743 = vmatpush1.msra.mxu0 0.0
    %744 = vmatprep.subr.mxu0 0.0
    %745 = vmatpush1.msra.mxu0 0.0
    %746 = vmatprep.subr.mxu0 0.0
    %747 = vmatpush1.msra.mxu0 0.0
    %748 = vmatprep.subr.mxu0 0.0
    %749 = vmatpush1.msra.mxu0 0.0
    %750 = vmatprep.subr.mxu0 0.0
    %751 = vmatpush1.msra.mxu0 0.0
    %752 = vmatprep.subr.mxu0 0.0
    %753 = vmatpush1.msra.mxu0 0.0
    %754 = vmatprep.subr.mxu0 0.0
    %755 = vmatpush1.msra.mxu0 0.0
    %756 = vmatprep.mubr.f32.mxu0 0.0
    %757 = vmatmul.mubr.f32.gmra.mrb[0].mxu0 %v673
    %v758 = vpop.f32.mrb[0].mxu0
    %v759 = vadd.f32 %v690, %v758
    %v760 = vpop.f32.mrb[0].mxu0
    %761 = vdwg.mxu0
    %vm762 = vcmp.eq.s32.totalorder %v50, 0
    %v763 = vxor.u32 %v759, 2147483648
    %v764 = vmul.f32 %v763, 1.442695
    %v765 = vpow.pop %v764
    %v766 = vadd.f32 %v765, 1.0
    %v767 = vrcp.pop %v766
    %v768 = vmul.f32 1.0, %v767
    %v769 = vsel %vm762, %v768, %v759
    %v771 = vrot.slane %v769, 7
    %vm773 = vcmask 1040384
    %v774 = vsel %vm773, %v413, %v771
    %775 = vst [vmem:[#allocation7] sm:$0x3] %v774
    // Predicated region
    $region30: #{tpu_custom_call.1} parent=1 // pred_check
      _
    $region31: #{tpu_custom_call.1} parent=1 // pred_check_branch
      %777 = sbr.rel (0) target = $region33
    $region32: #{tpu_custom_call.1} parent=1 // pred_region
      %s779 = ssub.s32 32, 32
      %780 = vsyncadd [#allocation4], %s779
      %s782 = sshll.u32 [#allocation7], 4
      %s783 = int_to_ptr.vmem [resolvable:$true] %s782
      %785 = dma.vmem_to_hbm [thread:$0]  %s783, 32, %s5, [#allocation4]
    $region33: #{tpu_custom_call.1} parent=1 // pred_fallthru
      _
    // Predicated region
    $region34: #{tpu_custom_call.1} parent=1 // pred_check
      _
    $region35: #{tpu_custom_call.1} parent=1 // pred_check_branch
      %787 = sbr.rel (0) target = $region37
    $region36: #{tpu_custom_call.1} parent=1 // pred_region
      %788 = dma.done [#allocation4], 32
    $region37: #{tpu_custom_call.1} parent=1 // pred_fallthru
      _
    %789 = vsyncpa [#allocation3], 1
    %790 = vsyncpa [#allocation6], 1
    %791 = vsyncpa [#allocation4], 1

</llo_original>
